<compile_context>
chip_gen: v5e
topology: v5e:2x2
jax: 0.10.0
libtpu: 0.0.40
codegen_flags: <defaults>
</compile_context>

<pallas_src>
import functools
import math

import jax
import jax.numpy as jnp
import numpy as np
from jax.experimental import pallas as pl
from jax.experimental.pallas import tpu as pltpu


def _split_heads(z, bblk, seq, num_heads, hd):
    """(bblk*seq, H*hd) -> (H*bblk, seq, hd); ordering h-major, b-minor.

    Matches torch.cat(torch.chunk(., H, dim=-1), dim=0) within the block.
    Only cheap ops: lane slices, leading-dim reshapes, axis-0 concat.
    """
    pieces = []
    for h in range(num_heads):
        zh = z[:, h * hd:(h + 1) * hd]            # (bblk*seq, hd) lane slice
        pieces.append(zh.reshape(bblk, seq, hd))  # split leading dim only
    return jnp.concatenate(pieces, axis=0)        # (H*bblk, seq, hd)


def _merge_heads(z, bblk, seq, num_heads, hd):
    """(H*bblk, seq, hd) -> (bblk*seq, H*hd); inverse of _split_heads."""
    pieces = [z[h * bblk:(h + 1) * bblk] for h in range(num_heads)]
    cat = jnp.concatenate(pieces, axis=-1)        # (bblk, seq, H*hd)
    return cat.reshape(bblk * seq, num_heads * hd)


def _attention_tail(q, k, v, wp_ref, bp_ref, out_ref, *, num_heads):
    """q: (Bblk*T, hidden), k/v: (Bblk*S, hidden) f32; writes out_ref."""
    bblk, T, hidden = out_ref.shape
    S = k.shape[0] // bblk
    hd = hidden // num_heads
    scale = 1.0 / math.sqrt(hd)

    # Fold 1/sqrt(hd) into q once (T*hidden muls instead of H*T*S).
    qh = _split_heads(q * scale, bblk, T, num_heads, hd).astype(jnp.bfloat16)
    kh = _split_heads(k, bblk, S, num_heads, hd).astype(jnp.bfloat16)
    vh = _split_heads(v, bblk, S, num_heads, hd).astype(jnp.bfloat16)

    # Per-(head, batch-row) scores; K is consumed transposed via dimension
    # numbers (no explicit transpose).
    s = jnp.einsum('ntd,nsd->nts', qh, kh, preferred_element_type=jnp.float32)
    s = s - jnp.max(s, axis=-1, keepdims=True)
    p = jnp.exp(s)
    p = p / jnp.sum(p, axis=-1, keepdims=True)    # exact divide (f32)

    ho = jnp.einsum('nts,nsd->ntd', p.astype(jnp.bfloat16), vh,
                    preferred_element_type=jnp.float32)

    # Single K = hidden output projection (no per-head matmuls / reduce).
    merged = _merge_heads(ho, bblk, T, num_heads, hd).astype(jnp.bfloat16)
    out = jnp.dot(merged, wp_ref[...],
                  preferred_element_type=jnp.float32) + bp_ref[...]

    # TODO(synk): nn.Dropout is identity in eval mode; training-mode dropout is
    # not modeled here.
    # NOTE: with hidden < 128 this store is lane-masked; producing a lane-dense
    # (Bblk, T*hidden) slab would require an in-kernel cross-lane relayout of
    # the projection result, which costs more than it saves at TESTAM's sizes.
    # When hidden is a multiple of 128 the store is already unmasked.
    out_ref[...] = out.reshape(bblk, T, hidden).astype(out_ref.dtype)


def _self_attention_kernel(x_ref, wqkv_ref, bqkv_ref, wp_ref, bp_ref, out_ref,
                           *, num_heads):
    bblk, T, in_dim = x_ref.shape
    hidden = wp_ref.shape[0]
    # One fused QKV matmul: (Bblk*T, in) @ (in, 3*hidden).
    x2 = x_ref[...].reshape(bblk * T, in_dim).astype(jnp.bfloat16)
    qkv = jnp.dot(x2, wqkv_ref[...],
                  preferred_element_type=jnp.float32) + bqkv_ref[...]
    q = qkv[:, :hidden]
    k = qkv[:, hidden:2 * hidden]
    v = qkv[:, 2 * hidden:]
    _attention_tail(q, k, v, wp_ref, bp_ref, out_ref, num_heads=num_heads)


def _cross_attention_kernel(x_ref, kv_ref, wq_ref, bq_ref, wkv_ref, bkv_ref,
                            wp_ref, bp_ref, out_ref, *, num_heads):
    bblk, T, in_dim = x_ref.shape
    _, S, _ = kv_ref.shape
    hidden = wp_ref.shape[0]
    x2 = x_ref[...].reshape(bblk * T, in_dim).astype(jnp.bfloat16)
    kv2 = kv_ref[...].reshape(bblk * S, in_dim).astype(jnp.bfloat16)
    q = jnp.dot(x2, wq_ref[...],
                preferred_element_type=jnp.float32) + bq_ref[...]
    kvp = jnp.dot(kv2, wkv_ref[...],
                  preferred_element_type=jnp.float32) + bkv_ref[...]
    k = kvp[:, :hidden]
    v = kvp[:, hidden:]
    _attention_tail(q, k, v, wp_ref, bp_ref, out_ref, num_heads=num_heads)


def qkv_attention(x, kv, params, num_heads, *, target_rows=256):
    """Forward pass of QKVAttention.  kv=None means self-attention (kv = x)."""
    B, T, in_dim = x.shape
    hidden = params["wq"].shape[1]
    assert hidden % num_heads == 0, "hidden_dim must be divisible by num_heads"
    out_dtype = x.dtype
    wdt = jnp.bfloat16

    # Batch-row blocking: aim for Bblk*T ~ target_rows (MXU row fill), but
    # keep Bblk a divisor of B so the grid is exact.
    bblk = max(1, min(B, max(1, target_rows // max(T, 1))))
    while B % bblk:
        bblk -= 1
    grid = (B // bblk,)

    wp = params["wp"].astype(wdt)                           # (hidden, hidden)
    bp = params["bp"].reshape(1, hidden).astype(jnp.float32)

    def rep(shape):  # full-array block, constant index -> resident weights
        return pl.BlockSpec(shape, lambda i: (0,) * len(shape))

    x_spec = pl.BlockSpec((bblk, T, in_dim), lambda i: (i, 0, 0))
    out_spec = pl.BlockSpec((bblk, T, hidden), lambda i: (i, 0, 0))

    if kv is None:
        # Self-attention: fuse Wq/Wk/Wv -> one (in, 3*hidden) weight.
        wqkv = jnp.concatenate(
            [params["wq"], params["wk"], params["wv"]], axis=1).astype(wdt)
        bqkv = jnp.concatenate(
            [params["bq"], params["bk"], params["bv"]]
        ).reshape(1, 3 * hidden).astype(jnp.float32)
        kernel = functools.partial(_self_attention_kernel, num_heads=num_heads)
        in_specs = [x_spec,
                    rep((in_dim, 3 * hidden)), rep((1, 3 * hidden)),
                    rep((hidden, hidden)), rep((1, hidden))]
        operands = (x, wqkv, bqkv, wp, bp)
    else:
        Bk, S, in_dim_k = kv.shape
        assert Bk == B and in_dim_k == in_dim
        wq = params["wq"].astype(wdt)
        bq = params["bq"].reshape(1, hidden).astype(jnp.float32)
        wkv = jnp.concatenate([params["wk"], params["wv"]], axis=1).astype(wdt)
        bkv = jnp.concatenate(
            [params["bk"], params["bv"]]).reshape(1, 2 * hidden).astype(jnp.float32)
        kv_spec = pl.BlockSpec((bblk, S, in_dim), lambda i: (i, 0, 0))
        kernel = functools.partial(_cross_attention_kernel, num_heads=num_heads)
        in_specs = [x_spec, kv_spec,
                    rep((in_dim, hidden)), rep((1, hidden)),
                    rep((in_dim, 2 * hidden)), rep((1, 2 * hidden)),
                    rep((hidden, hidden)), rep((1, hidden))]
        operands = (x, kv, wq, bq, wkv, bkv, wp, bp)

    return pl.pallas_call(
        kernel,
        out_shape=jax.ShapeDtypeStruct((B, T, hidden), out_dtype),
        grid_spec=pltpu.PrefetchScalarGridSpec(
            num_scalar_prefetch=0,
            grid=grid,
            in_specs=in_specs,
            out_specs=out_spec,
        ),
        compiler_params=pltpu.CompilerParams(
            dimension_semantics=("parallel",),
        ),
    )(*operands)


def qkv_attention_reference(x, kv, params, num_heads):
    """Pure-JAX f32 reference matching the PyTorch forward exactly."""
    q = x @ params["wq"] + params["bq"]
    k = kv @ params["wk"] + params["bk"]
    v = kv @ params["wv"] + params["bv"]
    hd = q.shape[-1] // num_heads
    # torch.cat(torch.chunk(., H, dim=-1), dim=0)
    q = jnp.concatenate(jnp.split(q, num_heads, axis=-1), axis=0)
    k = jnp.concatenate(jnp.split(k, num_heads, axis=-1), axis=0)
    v = jnp.concatenate(jnp.split(v, num_heads, axis=-1), axis=0)
    s = jnp.einsum("btd,bsd->bts", q, k) / math.sqrt(hd)
    p = jax.nn.softmax(s, axis=-1)
    ho = jnp.einsum("bts,bsd->btd", p, v)
    out = jnp.concatenate(jnp.split(ho, num_heads, axis=0), axis=-1)
    return out @ params["wp"] + params["bp"]


if __name__ == "__main__":
    B, T = 2, 8
    in_dim, hidden_dim, num_heads = 16, 32, 4
    dropout_p = 0.1  # eval-mode dropout == identity

    key = jax.random.PRNGKey(0)
    keys = jax.random.split(key, 10)
    params = {
        "wq": 0.1 * jax.random.normal(keys[0], (in_dim, hidden_dim), jnp.float32),
        "bq": 0.1 * jax.random.normal(keys[1], (hidden_dim,), jnp.float32),
        "wk": 0.1 * jax.random.normal(keys[2], (in_dim, hidden_dim), jnp.float32),
        "bk": 0.1 * jax.random.normal(keys[3], (hidden_dim,), jnp.float32),
        "wv": 0.1 * jax.random.normal(keys[4], (in_dim, hidden_dim), jnp.float32),
        "bv": 0.1 * jax.random.normal(keys[5], (hidden_dim,), jnp.float32),
        "wp": 0.1 * jax.random.normal(keys[6], (hidden_dim, hidden_dim), jnp.float32),
        "bp": 0.1 * jax.random.normal(keys[7], (hidden_dim,), jnp.float32),
    }
    x = jax.random.normal(keys[8], (B, T, in_dim), jnp.float32)
    kv = jax.random.normal(keys[9], (B, T, in_dim), jnp.float32)

    # MXU contractions use bf16 operands (f32 accumulation), so tolerance is
    # looser than a pure-f32 comparison would need.
    TOL = dict(rtol=2e-2, atol=2e-2)

    # Self-attention path: forward(x, kv=None) -> kv = x.
    out_self = jax.block_until_ready(qkv_attention(x, None, params, num_heads))
    ref_self = qkv_attention_reference(x, x, params, num_heads)
    np.testing.assert_allclose(np.asarray(out_self), np.asarray(ref_self), **TOL)

    # Cross-attention path: forward(x, kv).
    out_cross = jax.block_until_ready(qkv_attention(x, kv, params, num_heads))
    ref_cross = qkv_attention_reference(x, kv, params, num_heads)
    np.testing.assert_allclose(np.asarray(out_cross), np.asarray(ref_cross), **TOL)

    print("KERNEL_OK")
</pallas_src>

<mosaic_0001>
module attributes {stable_mosaic.version = 11 : i64} {
  func.func @_self_attention_kernel(%arg0: i32, %arg1: memref<2x8x16xf32, #tpu.memory_space<vmem>>, %arg2: memref<16x96xbf16, #tpu.memory_space<vmem>>, %arg3: memref<1x96xf32, #tpu.memory_space<vmem>>, %arg4: memref<32x32xbf16, #tpu.memory_space<vmem>>, %arg5: memref<1x32xf32, #tpu.memory_space<vmem>>, %arg6: memref<2x8x32xf32, #tpu.memory_space<vmem>>) attributes {dimension_semantics = [#tpu.dimension_semantics<parallel>], iteration_bounds = array<i64: 1>, scalar_prefetch = 0 : i64, scratch_operands = 0 : i64, tpu.core_type = #tpu.core_type<tc>, window_params = [{transform_indices = @transform_0, window_bounds = array<i64: 2, 8, 16>}, {pipeline_mode = #tpu.pipeline_mode<synchronous>, transform_indices = @transform_1, window_bounds = array<i64: 16, 96>}, {pipeline_mode = #tpu.pipeline_mode<synchronous>, transform_indices = @transform_2, window_bounds = array<i64: 1, 96>}, {pipeline_mode = #tpu.pipeline_mode<synchronous>, transform_indices = @transform_3, window_bounds = array<i64: 32, 32>}, {pipeline_mode = #tpu.pipeline_mode<synchronous>, transform_indices = @transform_4, window_bounds = array<i64: 1, 32>}, {transform_indices = @transform_5, window_bounds = array<i64: 2, 8, 32>}]} {
    %c0 = arith.constant 0 : index
    %c0_0 = arith.constant 0 : index
    %c0_1 = arith.constant 0 : index
    %0 = vector.load %arg1[%c0, %c0_0, %c0_1] : memref<2x8x16xf32, #tpu.memory_space<vmem>>, vector<2x8x16xf32>
    %1 = vector.shape_cast %0 : vector<2x8x16xf32> to vector<16x16xf32>
    %2 = arith.truncf %1 : vector<16x16xf32> to vector<16x16xbf16>
    %c0_2 = arith.constant 0 : index
    %c0_3 = arith.constant 0 : index
    %3 = vector.load %arg2[%c0_2, %c0_3] : memref<16x96xbf16, #tpu.memory_space<vmem>>, vector<16x96xbf16>
    %cst = arith.constant dense<0.000000e+00> : vector<16x96xf32>
    %4 = tpu.matmul %2, %3, %cst {dimension_numbers = #tpu.dot_dimension_numbers<[1], [0], [0], [1], [0, 0, 1, 1], [], []>} : vector<16x16xbf16>, vector<16x96xbf16>, vector<16x96xf32> -> vector<16x96xf32>
    %c0_4 = arith.constant 0 : index
    %c0_5 = arith.constant 0 : index
    %5 = vector.load %arg3[%c0_4, %c0_5] : memref<1x96xf32, #tpu.memory_space<vmem>>, vector<1x96xf32>
    %6 = vector.broadcast %5 : vector<1x96xf32> to vector<16x96xf32>
    %7 = arith.addf %4, %6 : vector<16x96xf32>
    %8 = vector.extract_strided_slice %7 {offsets = [0, 0], sizes = [16, 32], strides = [1, 1]} : vector<16x96xf32> to vector<16x32xf32>
    %9 = vector.extract_strided_slice %7 {offsets = [0, 32], sizes = [16, 32], strides = [1, 1]} : vector<16x96xf32> to vector<16x32xf32>
    %10 = vector.extract_strided_slice %7 {offsets = [0, 64], sizes = [16, 32], strides = [1, 1]} : vector<16x96xf32> to vector<16x32xf32>
    %cst_6 = arith.constant 0.353553385 : f32
    %11 = vector.broadcast %cst_6 : f32 to vector<16x32xf32>
    %12 = arith.mulf %8, %11 : vector<16x32xf32>
    %13 = vector.extract_strided_slice %12 {offsets = [0, 0], sizes = [16, 8], strides = [1, 1]} : vector<16x32xf32> to vector<16x8xf32>
    %14 = vector.shape_cast %13 : vector<16x8xf32> to vector<2x8x8xf32>
    %15 = vector.extract_strided_slice %12 {offsets = [0, 8], sizes = [16, 8], strides = [1, 1]} : vector<16x32xf32> to vector<16x8xf32>
    %16 = vector.shape_cast %15 : vector<16x8xf32> to vector<2x8x8xf32>
    %17 = vector.extract_strided_slice %12 {offsets = [0, 16], sizes = [16, 8], strides = [1, 1]} : vector<16x32xf32> to vector<16x8xf32>
    %18 = vector.shape_cast %17 : vector<16x8xf32> to vector<2x8x8xf32>
    %19 = vector.extract_strided_slice %12 {offsets = [0, 24], sizes = [16, 8], strides = [1, 1]} : vector<16x32xf32> to vector<16x8xf32>
    %20 = vector.shape_cast %19 : vector<16x8xf32> to vector<2x8x8xf32>
    %21 = tpu.concatenate %14, %16, %18, %20 in 0 : vector<2x8x8xf32>, vector<2x8x8xf32>, vector<2x8x8xf32>, vector<2x8x8xf32> -> vector<8x8x8xf32>
    %22 = arith.truncf %21 : vector<8x8x8xf32> to vector<8x8x8xbf16>
    %23 = vector.extract_strided_slice %9 {offsets = [0, 0], sizes = [16, 8], strides = [1, 1]} : vector<16x32xf32> to vector<16x8xf32>
    %24 = vector.shape_cast %23 : vector<16x8xf32> to vector<2x8x8xf32>
    %25 = vector.extract_strided_slice %9 {offsets = [0, 8], sizes = [16, 8], strides = [1, 1]} : vector<16x32xf32> to vector<16x8xf32>
    %26 = vector.shape_cast %25 : vector<16x8xf32> to vector<2x8x8xf32>
    %27 = vector.extract_strided_slice %9 {offsets = [0, 16], sizes = [16, 8], strides = [1, 1]} : vector<16x32xf32> to vector<16x8xf32>
    %28 = vector.shape_cast %27 : vector<16x8xf32> to vector<2x8x8xf32>
    %29 = vector.extract_strided_slice %9 {offsets = [0, 24], sizes = [16, 8], strides = [1, 1]} : vector<16x32xf32> to vector<16x8xf32>
    %30 = vector.shape_cast %29 : vector<16x8xf32> to vector<2x8x8xf32>
    %31 = tpu.concatenate %24, %26, %28, %30 in 0 : vector<2x8x8xf32>, vector<2x8x8xf32>, vector<2x8x8xf32>, vector<2x8x8xf32> -> vector<8x8x8xf32>
    %32 = arith.truncf %31 : vector<8x8x8xf32> to vector<8x8x8xbf16>
    %33 = vector.extract_strided_slice %10 {offsets = [0, 0], sizes = [16, 8], strides = [1, 1]} : vector<16x32xf32> to vector<16x8xf32>
    %34 = vector.shape_cast %33 : vector<16x8xf32> to vector<2x8x8xf32>
    %35 = vector.extract_strided_slice %10 {offsets = [0, 8], sizes = [16, 8], strides = [1, 1]} : vector<16x32xf32> to vector<16x8xf32>
    %36 = vector.shape_cast %35 : vector<16x8xf32> to vector<2x8x8xf32>
    %37 = vector.extract_strided_slice %10 {offsets = [0, 16], sizes = [16, 8], strides = [1, 1]} : vector<16x32xf32> to vector<16x8xf32>
    %38 = vector.shape_cast %37 : vector<16x8xf32> to vector<2x8x8xf32>
    %39 = vector.extract_strided_slice %10 {offsets = [0, 24], sizes = [16, 8], strides = [1, 1]} : vector<16x32xf32> to vector<16x8xf32>
    %40 = vector.shape_cast %39 : vector<16x8xf32> to vector<2x8x8xf32>
    %41 = tpu.concatenate %34, %36, %38, %40 in 0 : vector<2x8x8xf32>, vector<2x8x8xf32>, vector<2x8x8xf32>, vector<2x8x8xf32> -> vector<8x8x8xf32>
    %42 = arith.truncf %41 : vector<8x8x8xf32> to vector<8x8x8xbf16>
    "tpu.trace_start"() <{level = 10 : i32, message = "ntd,nsd->nts"}> : () -> ()
    %cst_7 = arith.constant dense<0.000000e+00> : vector<8x8x8xf32>
    %43 = tpu.matmul %22, %32, %cst_7 {dimension_numbers = #tpu.dot_dimension_numbers<[2], [2], [1], [1], [0, 0, 0, 1, 1, 1], [0], [0]>} : vector<8x8x8xbf16>, vector<8x8x8xbf16>, vector<8x8x8xf32> -> vector<8x8x8xf32>
    "tpu.trace_stop"() : () -> ()
    %cst_8 = arith.constant dense<0xFF800000> : vector<8x8xf32>
    %44 = vector.multi_reduction <maximumf>, %43, %cst_8 [2] : vector<8x8x8xf32> to vector<8x8xf32>
    %45 = vector.shape_cast %44 : vector<8x8xf32> to vector<8x8x1xf32>
    %46 = vector.broadcast %45 : vector<8x8x1xf32> to vector<8x8x8xf32>
    %47 = arith.subf %43, %46 : vector<8x8x8xf32>
    %48 = math.exp %47 : vector<8x8x8xf32>
    %cst_9 = arith.constant dense<0.000000e+00> : vector<8x8xf32>
    %49 = vector.multi_reduction <add>, %48, %cst_9 [2] : vector<8x8x8xf32> to vector<8x8xf32>
    %50 = vector.shape_cast %49 : vector<8x8xf32> to vector<8x8x1xf32>
    %51 = vector.broadcast %50 : vector<8x8x1xf32> to vector<8x8x8xf32>
    %52 = arith.divf %48, %51 : vector<8x8x8xf32>
    %53 = arith.truncf %52 : vector<8x8x8xf32> to vector<8x8x8xbf16>
    "tpu.trace_start"() <{level = 10 : i32, message = "nts,nsd->ntd"}> : () -> ()
    %cst_10 = arith.constant dense<0.000000e+00> : vector<8x8x8xf32>
    %54 = tpu.matmul %53, %42, %cst_10 {dimension_numbers = #tpu.dot_dimension_numbers<[2], [1], [1], [2], [0, 0, 0, 1, 1, 2], [0], [0]>} : vector<8x8x8xbf16>, vector<8x8x8xbf16>, vector<8x8x8xf32> -> vector<8x8x8xf32>
    "tpu.trace_stop"() : () -> ()
    %55 = vector.extract_strided_slice %54 {offsets = [0, 0, 0], sizes = [2, 8, 8], strides = [1, 1, 1]} : vector<8x8x8xf32> to vector<2x8x8xf32>
    %56 = vector.extract_strided_slice %54 {offsets = [2, 0, 0], sizes = [2, 8, 8], strides = [1, 1, 1]} : vector<8x8x8xf32> to vector<2x8x8xf32>
    %57 = vector.extract_strided_slice %54 {offsets = [4, 0, 0], sizes = [2, 8, 8], strides = [1, 1, 1]} : vector<8x8x8xf32> to vector<2x8x8xf32>
    %58 = vector.extract_strided_slice %54 {offsets = [6, 0, 0], sizes = [2, 8, 8], strides = [1, 1, 1]} : vector<8x8x8xf32> to vector<2x8x8xf32>
    %59 = tpu.concatenate %55, %56, %57, %58 in 2 : vector<2x8x8xf32>, vector<2x8x8xf32>, vector<2x8x8xf32>, vector<2x8x8xf32> -> vector<2x8x32xf32>
    %60 = vector.shape_cast %59 : vector<2x8x32xf32> to vector<16x32xf32>
    %61 = arith.truncf %60 : vector<16x32xf32> to vector<16x32xbf16>
    %c0_11 = arith.constant 0 : index
    %c0_12 = arith.constant 0 : index
    %62 = vector.load %arg4[%c0_11, %c0_12] : memref<32x32xbf16, #tpu.memory_space<vmem>>, vector<32x32xbf16>
    %cst_13 = arith.constant dense<0.000000e+00> : vector<16x32xf32>
    %63 = tpu.matmul %61, %62, %cst_13 {dimension_numbers = #tpu.dot_dimension_numbers<[1], [0], [0], [1], [0, 0, 1, 1], [], []>} : vector<16x32xbf16>, vector<32x32xbf16>, vector<16x32xf32> -> vector<16x32xf32>
    %c0_14 = arith.constant 0 : index
    %c0_15 = arith.constant 0 : index
    %64 = vector.load %arg5[%c0_14, %c0_15] : memref<1x32xf32, #tpu.memory_space<vmem>>, vector<1x32xf32>
    %65 = vector.broadcast %64 : vector<1x32xf32> to vector<16x32xf32>
    %66 = arith.addf %63, %65 : vector<16x32xf32>
    %67 = vector.shape_cast %66 : vector<16x32xf32> to vector<2x8x32xf32>
    %c0_16 = arith.constant 0 : index
    %c0_17 = arith.constant 0 : index
    %c0_18 = arith.constant 0 : index
    %68 = vector.load %arg6[%c0_16, %c0_17, %c0_18] : memref<2x8x32xf32, #tpu.memory_space<vmem>>, vector<2x8x32xf32>
    tpu.vector_store %arg6[%c0_16, %c0_17, %c0_18], %67 {strides = array<i32>} : memref<2x8x32xf32, #tpu.memory_space<vmem>>, vector<2x8x32xf32>,
    return
  }
  func.func @transform_0(%arg0: i32) -> (i32, i32, i32) {
    %c0_i32 = arith.constant 0 : i32
    %c0_i32_0 = arith.constant 0 : i32
    %c0_i32_1 = arith.constant 0 : i32
    return %arg0, %c0_i32, %c0_i32_0 : i32, i32, i32
  }
  func.func @transform_1(%arg0: i32) -> (i32, i32) {
    %c0_i32 = arith.constant 0 : i32
    %c0_i32_0 = arith.constant 0 : i32
    %c0_i32_1 = arith.constant 0 : i32
    return %c0_i32, %c0_i32_0 : i32, i32
  }
  func.func @transform_2(%arg0: i32) -> (i32, i32) {
    %c0_i32 = arith.constant 0 : i32
    %c0_i32_0 = arith.constant 0 : i32
    %c0_i32_1 = arith.constant 0 : i32
    return %c0_i32, %c0_i32_0 : i32, i32
  }
  func.func @transform_3(%arg0: i32) -> (i32, i32) {
    %c0_i32 = arith.constant 0 : i32
    %c0_i32_0 = arith.constant 0 : i32
    %c0_i32_1 = arith.constant 0 : i32
    return %c0_i32, %c0_i32_0 : i32, i32
  }
  func.func @transform_4(%arg0: i32) -> (i32, i32) {
    %c0_i32 = arith.constant 0 : i32
    %c0_i32_0 = arith.constant 0 : i32
    %c0_i32_1 = arith.constant 0 : i32
    return %c0_i32, %c0_i32_0 : i32, i32
  }
  func.func @transform_5(%arg0: i32) -> (i32, i32, i32) {
    %c0_i32 = arith.constant 0 : i32
    %c0_i32_0 = arith.constant 0 : i32
    %c0_i32_1 = arith.constant 0 : i32
    return %arg0, %c0_i32, %c0_i32_0 : i32, i32, i32
  }
}

</mosaic_0001>

<llo_original>
// kernel: tpu_custom_call.1
$region0: #{tpu_custom_call.1}
  #allocation0 [shape = 'u32[]', space=smem, size = 0x4, offset = 0x4, fixed_abs, tag = 'smem constant byte address 0x4 - core index']
  #allocation1 [shape = 'u32[72,128]{1,0:T(1,128)}', space=vmem, size = 0x9000, scoped, tag = 'internal scratch']
  %s0 = inlined_call_operand.hbm [shape: f32[2,8,16], index: 0, kind: input, shape index: {}]
  %s1 = inlined_call_operand.hbm [shape: bf16[16,96], index: 1, kind: input, shape index: {}]
  %s2 = inlined_call_operand.vmem [shape: f32[1,96], index: 2, kind: input, shape index: {}]
  %s3 = inlined_call_operand.hbm [shape: bf16[32,32], index: 3, kind: input, shape index: {}]
  %s4 = inlined_call_operand.vmem [shape: f32[1,32], index: 4, kind: input, shape index: {}]
  %s5 = inlined_call_operand.hbm [shape: f32[2,8,32], index: 5, kind: output, shape index: {}]
  %s6 = sld [smem:[#allocation0]]
  $region42: #{tpu_custom_call.1} parent=0
    _
  %s8 = ssub.s32 1, %s6
  %s9 = scalar_select 0, %s8, %s6
  $region1: #{tpu_custom_call.1} parent=0
    #allocation2 [shape = 'u8[8192]{0}', space=vmem, size = 0x2000, scoped, tag = 'input window, operand 0, single buffered']
    #allocation3 [shape = 's32[1]{0}', space=sflag, size = 0x4, scoped, tag = 'scoped memory for tpu_custom_call.1']
    #allocation4 [shape = 's32[1]{0}', space=sflag, size = 0x4, scoped, tag = 'scoped memory for tpu_custom_call.1']
    #allocation5 [shape = 'u8[4096]{0}', space=vmem, size = 0x1000, scoped, tag = 'input window, operand 1, single buffered']
    #allocation6 [shape = 's32[1]{0}', space=sflag, size = 0x4, scoped, tag = 'scoped memory for tpu_custom_call.1']
    #allocation7 [shape = 'u8[8192]{0}', space=vmem, size = 0x2000, scoped, tag = 'input window, operand 3, single buffered']
    #allocation8 [shape = 'u8[8192]{0}', space=vmem, size = 0x2000, scoped, tag = 'output window, operand 0, single buffered']
    %10 = vsyncpa [#allocation3], 0
    %11 = vsyncpa [#allocation6], 0
    %12 = vsyncpa [#allocation4], 0
    // Predicated region
    $region2: #{tpu_custom_call.1} parent=1 // pred_check
      _
    $region3: #{tpu_custom_call.1} parent=1 // pred_check_branch
      %14 = sbr.rel (0) target = $region5
    $region4: #{tpu_custom_call.1} parent=1 // pred_region
      %16 = vsyncadd [#allocation3], 0
      %s17 = sshll.u32 %s0, 4
      %s18 = int_to_ptr.hbm [resolvable:$true] %s17
      %s19 = sshll.u32 [#allocation2], 4
      %s20 = int_to_ptr.vmem [resolvable:$true] %s19
      %25 = dma.hbm_to_vmem [thread:$0]  %s18, 256, %s20, [#allocation3], 128, 128, 8
    $region5: #{tpu_custom_call.1} parent=1 // pred_fallthru
      _
    // Predicated region
    $region6: #{tpu_custom_call.1} parent=1 // pred_check
      _
    $region7: #{tpu_custom_call.1} parent=1 // pred_check_branch
      %27 = sbr.rel (0) target = $region9
    $region8: #{tpu_custom_call.1} parent=1 // pred_region
      %29 = vsyncadd [#allocation6], 0
      %s30 = sshll.u32 %s1, 4
      %s31 = int_to_ptr.hbm [resolvable:$true] %s30
      %s32 = sshll.u32 [#allocation5], 4
      %s33 = int_to_ptr.vmem [resolvable:$true] %s32
      %38 = dma.hbm_to_vmem [thread:$0]  %s31, 128, %s33, [#allocation6], 64, 64, 4
    $region9: #{tpu_custom_call.1} parent=1 // pred_fallthru
      _
    // Predicated region
    $region10: #{tpu_custom_call.1} parent=1 // pred_check
      _
    $region11: #{tpu_custom_call.1} parent=1 // pred_check_branch
      %40 = sbr.rel (0) target = $region13
    $region12: #{tpu_custom_call.1} parent=1 // pred_region
      _
    $region13: #{tpu_custom_call.1} parent=1 // pred_fallthru
      _
    // Predicated region
    $region14: #{tpu_custom_call.1} parent=1 // pred_check
      _
    $region15: #{tpu_custom_call.1} parent=1 // pred_check_branch
      %42 = sbr.rel (0) target = $region17
    $region16: #{tpu_custom_call.1} parent=1 // pred_region
      %44 = vsyncadd [#allocation6], 0
      %s45 = sshll.u32 %s3, 4
      %s46 = int_to_ptr.hbm [resolvable:$true] %s45
      %s47 = sshll.u32 [#allocation7], 4
      %s48 = int_to_ptr.vmem [resolvable:$true] %s47
      %53 = dma.hbm_to_vmem [thread:$0]  %s46, 256, %s48, [#allocation6], 64, 64, 4
    $region17: #{tpu_custom_call.1} parent=1 // pred_fallthru
      _
    // Predicated region
    $region18: #{tpu_custom_call.1} parent=1 // pred_check
      _
    $region19: #{tpu_custom_call.1} parent=1 // pred_check_branch
      %55 = sbr.rel (0) target = $region21
    $region20: #{tpu_custom_call.1} parent=1 // pred_region
      _
    $region21: #{tpu_custom_call.1} parent=1 // pred_fallthru
      _
    // Predicated region
    $region22: #{tpu_custom_call.1} parent=1 // pred_check
      _
    $region23: #{tpu_custom_call.1} parent=1 // pred_check_branch
      %57 = sbr.rel (0) target = $region25
    $region24: #{tpu_custom_call.1} parent=1 // pred_region
      %59 = dma.done [#allocation3], 256
    $region25: #{tpu_custom_call.1} parent=1 // pred_fallthru
      _
    // Predicated region
    $region26: #{tpu_custom_call.1} parent=1 // pred_check
      _
    $region27: #{tpu_custom_call.1} parent=1 // pred_check_branch
      %61 = sbr.rel (0) target = $region29
    $region28: #{tpu_custom_call.1} parent=1 // pred_region
      %63 = dma.done [#allocation6], 128
    $region29: #{tpu_custom_call.1} parent=1 // pred_fallthru
      _
    // Predicated region
    $region30: #{tpu_custom_call.1} parent=1 // pred_check
      _
    $region31: #{tpu_custom_call.1} parent=1 // pred_check_branch
      %65 = sbr.rel (0) target = $region33
    $region32: #{tpu_custom_call.1} parent=1 // pred_region
      %67 = dma.done [#allocation6], 256
    $region33: #{tpu_custom_call.1} parent=1 // pred_fallthru
      _
    %v69 = vld [vmem:[#allocation2] sm:$0xff]
    %v70 = vld [vmem:[#allocation2 + $0x8] sm:$0xff]
    %v71 = vpack.c.bf16 %v70, %v69
    %v72 = vld [vmem:[#allocation5] sm:$0xf]
    %v73 = vld [vmem:[#allocation5 + $0x4] sm:$0xf]
    %v74 = vld [vmem:[%s2] sm:$0x1]
    %v76 = vperm.slane %v74, 0
    %v80 = vunpack.c.l.b16 %v72
    %v81 = vunpack.c.l.b16 %v73
    %v82 = vpack.c.b16 %v81, %v80
    %vm84 = vcmask 130048
    %v86 = vsel %vm84, %v71, 0
    %88 = vmatpush.bf16.msra.mxu0 0
    %89 = vmatpush.bf16.msra.mxu0 0
    %90 = vmatpush.bf16.msra.mxu0 0
    %91 = vmatpush.bf16.msra.mxu0 0
    %92 = vmatpush.bf16.msra.mxu0 0
    %93 = vmatpush.bf16.msra.mxu0 0
    %94 = vmatpush.bf16.msra.mxu0 0
    %95 = vmatpush.bf16.msra.mxu0 %v82
    %96 = vmatmul.bf16.gmra.mxu0 %v86
    %v97 = vpop.f32.mrf.mxu0
    %v98 = vadd.f32 %v76, %v97
    %v99 = vpop.f32.mrf.mxu0
    %v100 = vadd.f32 %v76, %v99
    %101 = vdwg.mxu0
    %v102 = vmul.f32 %v98, 0.35355338
    %v103 = vmul.f32 %v100, 0.35355338
    %106 = vrot.lane.b32.xlu0 %v102, 120
    %v107 = vpop.permute.xlu0 %106
    %108 = vrot.lane.b32.xlu0 %v103, 120
    %v109 = vpop.permute.xlu0 %108
    %112 = vrot.lane.b32.xlu0 %v102, 112
    %v113 = vpop.permute.xlu0 %112
    %114 = vrot.lane.b32.xlu0 %v103, 112
    %v115 = vpop.permute.xlu0 %114
    %118 = vrot.lane.b32.xlu0 %v102, 104
    %v119 = vpop.permute.xlu0 %118
    %120 = vrot.lane.b32.xlu0 %v103, 104
    %v121 = vpop.permute.xlu0 %120
    %v124 = vpack.c.bf16 %v102, %v102
    %v125 = vpack.c.bf16 %v103, %v103
    %v126 = vpack.c.bf16 %v107, %v107
    %v127 = vpack.c.bf16 %v109, %v109
    %v128 = vpack.c.bf16 %v113, %v113
    %v129 = vpack.c.bf16 %v115, %v115
    %v130 = vpack.c.bf16 %v119, %v119
    %v131 = vpack.c.bf16 %v121, %v121
    %134 = vrot.lane.b32.xlu0 %v98, 120
    %v135 = vpop.permute.xlu0 %134
    %136 = vrot.lane.b32.xlu0 %v100, 120
    %v137 = vpop.permute.xlu0 %136
    %140 = vrot.lane.b32.xlu0 %v98, 112
    %v141 = vpop.permute.xlu0 %140
    %142 = vrot.lane.b32.xlu0 %v100, 112
    %v143 = vpop.permute.xlu0 %142
    %146 = vrot.lane.b32.xlu0 %v98, 104
    %v147 = vpop.permute.xlu0 %146
    %148 = vrot.lane.b32.xlu0 %v100, 104
    %v149 = vpop.permute.xlu0 %148
    %v152 = vpack.c.bf16 %v98, %v98
    %v153 = vpack.c.bf16 %v100, %v100
    %v154 = vpack.c.bf16 %v135, %v135
    %v155 = vpack.c.bf16 %v137, %v137
    %v156 = vpack.c.bf16 %v141, %v141
    %v157 = vpack.c.bf16 %v143, %v143
    %v158 = vpack.c.bf16 %v147, %v147
    %v159 = vpack.c.bf16 %v149, %v149
    %v161 = vunpack.c.l.b16 %v152
    %v162 = vpack.c.b16 %v161, %v161
    %163 = vrot.lane.b32.xlu0 %v162, 96
    %v164 = vpop.permute.xlu0 %163
    %vm165 = vcmask 64512
    %v167 = vsel %vm165, %v124, 0
    %v170 = vsel %vm165, %v164, 0
    %172 = vmatpush.bf16.xpose.msra.mxu0 0
    %173 = vmatpush.bf16.xpose.msra.mxu0 0
    %174 = vmatpush.bf16.xpose.msra.mxu0 0
    %175 = vmatpush.bf16.xpose.msra.mxu0 0
    %176 = vmatpush.bf16.xpose.msra.mxu0 0
    %177 = vmatpush.bf16.xpose.msra.mxu0 0
    %178 = vmatpush.bf16.xpose.msra.mxu0 0
    %179 = vmatpush.bf16.xpose.msra.mxu0 %v170
    %180 = vmatmul.bf16.gmra.mxu0 %v167
    %v181 = vpop.f32.mrf.mxu0
    %v182 = vadd.f32 0.0, %v181
    %v183 = vpop.f32.mrf.mxu0
    %184 = vdwg.mxu0
    %v186 = vunpack.c.l.b16 %v153
    %v187 = vpack.c.b16 %v186, %v186
    %188 = vrot.lane.b32.xlu0 %v187, 96
    %v189 = vpop.permute.xlu0 %188
    %v191 = vsel %vm165, %v125, 0
    %v194 = vsel %vm165, %v189, 0
    %196 = vmatpush.bf16.xpose.msra.mxu0 0
    %197 = vmatpush.bf16.xpose.msra.mxu0 0
    %198 = vmatpush.bf16.xpose.msra.mxu0 0
    %199 = vmatpush.bf16.xpose.msra.mxu0 0
    %200 = vmatpush.bf16.xpose.msra.mxu0 0
    %201 = vmatpush.bf16.xpose.msra.mxu0 0
    %202 = vmatpush.bf16.xpose.msra.mxu0 0
    %203 = vmatpush.bf16.xpose.msra.mxu0 %v194
    %204 = vmatmul.bf16.gmra.mxu0 %v191
    %v205 = vpop.f32.mrf.mxu0
    %v206 = vadd.f32 0.0, %v205
    %v207 = vpop.f32.mrf.mxu0
    %208 = vdwg.mxu0
    %v210 = vunpack.c.l.b16 %v154
    %v211 = vpack.c.b16 %v210, %v210
    %212 = vrot.lane.b32.xlu0 %v211, 96
    %v213 = vpop.permute.xlu0 %212
    %v215 = vsel %vm165, %v126, 0
    %v218 = vsel %vm165, %v213, 0
    %220 = vmatpush.bf16.xpose.msra.mxu0 0
    %221 = vmatpush.bf16.xpose.msra.mxu0 0
    %222 = vmatpush.bf16.xpose.msra.mxu0 0
    %223 = vmatpush.bf16.xpose.msra.mxu0 0
    %224 = vmatpush.bf16.xpose.msra.mxu0 0
    %225 = vmatpush.bf16.xpose.msra.mxu0 0
    %226 = vmatpush.bf16.xpose.msra.mxu0 0
    %227 = vmatpush.bf16.xpose.msra.mxu0 %v218
    %228 = vmatmul.bf16.gmra.mxu0 %v215
    %v229 = vpop.f32.mrf.mxu0
    %v230 = vadd.f32 0.0, %v229
    %v231 = vpop.f32.mrf.mxu0
    %232 = vdwg.mxu0
    %v234 = vunpack.c.l.b16 %v155
    %v235 = vpack.c.b16 %v234, %v234
    %236 = vrot.lane.b32.xlu0 %v235, 96
    %v237 = vpop.permute.xlu0 %236
    %v239 = vsel %vm165, %v127, 0
    %v242 = vsel %vm165, %v237, 0
    %244 = vmatpush.bf16.xpose.msra.mxu0 0
    %245 = vmatpush.bf16.xpose.msra.mxu0 0
    %246 = vmatpush.bf16.xpose.msra.mxu0 0
    %247 = vmatpush.bf16.xpose.msra.mxu0 0
    %248 = vmatpush.bf16.xpose.msra.mxu0 0
    %249 = vmatpush.bf16.xpose.msra.mxu0 0
    %250 = vmatpush.bf16.xpose.msra.mxu0 0
    %251 = vmatpush.bf16.xpose.msra.mxu0 %v242
    %252 = vmatmul.bf16.gmra.mxu0 %v239
    %v253 = vpop.f32.mrf.mxu0
    %v254 = vadd.f32 0.0, %v253
    %v255 = vpop.f32.mrf.mxu0
    %256 = vdwg.mxu0
    %v258 = vunpack.c.l.b16 %v156
    %v259 = vpack.c.b16 %v258, %v258
    %260 = vrot.lane.b32.xlu0 %v259, 96
    %v261 = vpop.permute.xlu0 %260
    %v263 = vsel %vm165, %v128, 0
    %v266 = vsel %vm165, %v261, 0
    %268 = vmatpush.bf16.xpose.msra.mxu0 0
    %269 = vmatpush.bf16.xpose.msra.mxu0 0
    %270 = vmatpush.bf16.xpose.msra.mxu0 0
    %271 = vmatpush.bf16.xpose.msra.mxu0 0
    %272 = vmatpush.bf16.xpose.msra.mxu0 0
    %273 = vmatpush.bf16.xpose.msra.mxu0 0
    %274 = vmatpush.bf16.xpose.msra.mxu0 0
    %275 = vmatpush.bf16.xpose.msra.mxu0 %v266
    %276 = vmatmul.bf16.gmra.mxu0 %v263
    %v277 = vpop.f32.mrf.mxu0
    %v278 = vadd.f32 0.0, %v277
    %v279 = vpop.f32.mrf.mxu0
    %280 = vdwg.mxu0
    %v282 = vunpack.c.l.b16 %v157
    %v283 = vpack.c.b16 %v282, %v282
    %284 = vrot.lane.b32.xlu0 %v283, 96
    %v285 = vpop.permute.xlu0 %284
    %v287 = vsel %vm165, %v129, 0
    %v290 = vsel %vm165, %v285, 0
    %292 = vmatpush.bf16.xpose.msra.mxu0 0
    %293 = vmatpush.bf16.xpose.msra.mxu0 0
    %294 = vmatpush.bf16.xpose.msra.mxu0 0
    %295 = vmatpush.bf16.xpose.msra.mxu0 0
    %296 = vmatpush.bf16.xpose.msra.mxu0 0
    %297 = vmatpush.bf16.xpose.msra.mxu0 0
    %298 = vmatpush.bf16.xpose.msra.mxu0 0
    %299 = vmatpush.bf16.xpose.msra.mxu0 %v290
    %300 = vmatmul.bf16.gmra.mxu0 %v287
    %v301 = vpop.f32.mrf.mxu0
    %v302 = vadd.f32 0.0, %v301
    %v303 = vpop.f32.mrf.mxu0
    %304 = vdwg.mxu0
    %v306 = vunpack.c.l.b16 %v158
    %v307 = vpack.c.b16 %v306, %v306
    %308 = vrot.lane.b32.xlu0 %v307, 96
    %v309 = vpop.permute.xlu0 %308
    %v311 = vsel %vm165, %v130, 0
    %v314 = vsel %vm165, %v309, 0
    %316 = vmatpush.bf16.xpose.msra.mxu0 0
    %317 = vmatpush.bf16.xpose.msra.mxu0 0
    %318 = vmatpush.bf16.xpose.msra.mxu0 0
    %319 = vmatpush.bf16.xpose.msra.mxu0 0
    %320 = vmatpush.bf16.xpose.msra.mxu0 0
    %321 = vmatpush.bf16.xpose.msra.mxu0 0
    %322 = vmatpush.bf16.xpose.msra.mxu0 0
    %323 = vmatpush.bf16.xpose.msra.mxu0 %v314
    %324 = vmatmul.bf16.gmra.mxu0 %v311
    %v325 = vpop.f32.mrf.mxu0
    %v326 = vadd.f32 0.0, %v325
    %v327 = vpop.f32.mrf.mxu0
    %328 = vdwg.mxu0
    %v330 = vunpack.c.l.b16 %v159
    %v331 = vpack.c.b16 %v330, %v330
    %332 = vrot.lane.b32.xlu0 %v331, 96
    %v333 = vpop.permute.xlu0 %332
    %v335 = vsel %vm165, %v131, 0
    %v338 = vsel %vm165, %v333, 0
    %340 = vmatpush.bf16.xpose.msra.mxu0 0
    %341 = vmatpush.bf16.xpose.msra.mxu0 0
    %342 = vmatpush.bf16.xpose.msra.mxu0 0
    %343 = vmatpush.bf16.xpose.msra.mxu0 0
    %344 = vmatpush.bf16.xpose.msra.mxu0 0
    %345 = vmatpush.bf16.xpose.msra.mxu0 0
    %346 = vmatpush.bf16.xpose.msra.mxu0 0
    %347 = vmatpush.bf16.xpose.msra.mxu0 %v338
    %348 = vmatmul.bf16.gmra.mxu0 %v335
    %v349 = vpop.f32.mrf.mxu0
    %v350 = vadd.f32 0.0, %v349
    %v351 = vpop.f32.mrf.mxu0
    %352 = vdwg.mxu0
    %v353 = vsel %vm165, %v182, -inf
    %354 = vmax.xlane.f32.xlu0 %v353
    %v355 = vpop.xlane.xlu0 %354
    %v356 = vsel %vm165, %v206, -inf
    %357 = vmax.xlane.f32.xlu0 %v356
    %v358 = vpop.xlane.xlu0 %357
    %v359 = vsel %vm165, %v230, -inf
    %360 = vmax.xlane.f32.xlu0 %v359
    %v361 = vpop.xlane.xlu0 %360
    %v362 = vsel %vm165, %v254, -inf
    %363 = vmax.xlane.f32.xlu0 %v362
    %v364 = vpop.xlane.xlu0 %363
    %v365 = vsel %vm165, %v278, -inf
    %366 = vmax.xlane.f32.xlu0 %v365
    %v367 = vpop.xlane.xlu0 %366
    %v368 = vsel %vm165, %v302, -inf
    %369 = vmax.xlane.f32.xlu0 %v368
    %v370 = vpop.xlane.xlu0 %369
    %v371 = vsel %vm165, %v326, -inf
    %372 = vmax.xlane.f32.xlu0 %v371
    %v373 = vpop.xlane.xlu0 %372
    %v374 = vsel %vm165, %v350, -inf
    %375 = vmax.xlane.f32.xlu0 %v374
    %v376 = vpop.xlane.xlu0 %375
    %v377 = vsub.f32 %v182, %v355
    %v378 = vsub.f32 %v206, %v358
    %v379 = vsub.f32 %v230, %v361
    %v380 = vsub.f32 %v254, %v364
    %v381 = vsub.f32 %v278, %v367
    %v382 = vsub.f32 %v302, %v370
    %v383 = vsub.f32 %v326, %v373
    %v384 = vsub.f32 %v350, %v376
    %v385 = vmul.f32 %v377, 1.442695
    %v386 = vpow.pop %v385
    %v387 = vmul.f32 %v378, 1.442695
    %v388 = vpow.pop %v387
    %v389 = vmul.f32 %v379, 1.442695
    %v390 = vpow.pop %v389
    %v391 = vmul.f32 %v380, 1.442695
    %v392 = vpow.pop %v391
    %v393 = vmul.f32 %v381, 1.442695
    %v394 = vpow.pop %v393
    %v395 = vmul.f32 %v382, 1.442695
    %v396 = vpow.pop %v395
    %v397 = vmul.f32 %v383, 1.442695
    %v398 = vpow.pop %v397
    %v399 = vmul.f32 %v384, 1.442695
    %v400 = vpow.pop %v399
    %v401 = vsel %vm165, %v386, 0.0
    %402 = vadd.xlane.f32.xlu0 %v401
    %v403 = vpop.xlane.xlu0 %402
    %v404 = vsel %vm165, %v388, 0.0
    %405 = vadd.xlane.f32.xlu0 %v404
    %v406 = vpop.xlane.xlu0 %405
    %v407 = vsel %vm165, %v390, 0.0
    %408 = vadd.xlane.f32.xlu0 %v407
    %v409 = vpop.xlane.xlu0 %408
    %v410 = vsel %vm165, %v392, 0.0
    %411 = vadd.xlane.f32.xlu0 %v410
    %v412 = vpop.xlane.xlu0 %411
    %v413 = vsel %vm165, %v394, 0.0
    %414 = vadd.xlane.f32.xlu0 %v413
    %v415 = vpop.xlane.xlu0 %414
    %v416 = vsel %vm165, %v396, 0.0
    %417 = vadd.xlane.f32.xlu0 %v416
    %v418 = vpop.xlane.xlu0 %417
    %v419 = vsel %vm165, %v398, 0.0
    %420 = vadd.xlane.f32.xlu0 %v419
    %v421 = vpop.xlane.xlu0 %420
    %v422 = vsel %vm165, %v400, 0.0
    %423 = vadd.xlane.f32.xlu0 %v422
    %v424 = vpop.xlane.xlu0 %423
    %v425 = vrcp.pop %v403
    %v426 = vmul.f32 %v403, %v425
    %v427 = vsub.f32 1.0, %v426
    %v428 = vmul.f32 %v425, %v427
    %v429 = vadd.f32 %v425, %v428
    %vm430 = vweird.f32 %v403
    %vm431 = vweird.f32 %v425
    %vm432 = vmor %vm430, %vm431
    %v433 = vsel %vm432, %v425, %v429
    %v434 = vand.u32 2147483647, %v403
    %vm435 = vcmp.eq.f32.partialorder %v434, 8.507059e+37
    %v436 = vand.u32 %v403, 2147483648
    %v437 = vor.u32 1.1754944e-38, %v436
    %v438 = vsel %vm435, %v437, %v433
    %v439 = vmul.f32 %v386, %v438
    %v440 = vrcp.pop %v406
    %v441 = vmul.f32 %v406, %v440
    %v442 = vsub.f32 1.0, %v441
    %v443 = vmul.f32 %v440, %v442
    %v444 = vadd.f32 %v440, %v443
    %vm445 = vweird.f32 %v406
    %vm446 = vweird.f32 %v440
    %vm447 = vmor %vm445, %vm446
    %v448 = vsel %vm447, %v440, %v444
    %v449 = vand.u32 2147483647, %v406
    %vm450 = vcmp.eq.f32.partialorder %v449, 8.507059e+37
    %v451 = vand.u32 %v406, 2147483648
    %v452 = vor.u32 1.1754944e-38, %v451
    %v453 = vsel %vm450, %v452, %v448
    %v454 = vmul.f32 %v388, %v453
    %v455 = vrcp.pop %v409
    %v456 = vmul.f32 %v409, %v455
    %v457 = vsub.f32 1.0, %v456
    %v458 = vmul.f32 %v455, %v457
    %v459 = vadd.f32 %v455, %v458
    %vm460 = vweird.f32 %v409
    %vm461 = vweird.f32 %v455
    %vm462 = vmor %vm460, %vm461
    %v463 = vsel %vm462, %v455, %v459
    %v464 = vand.u32 2147483647, %v409
    %vm465 = vcmp.eq.f32.partialorder %v464, 8.507059e+37
    %v466 = vand.u32 %v409, 2147483648
    %v467 = vor.u32 1.1754944e-38, %v466
    %v468 = vsel %vm465, %v467, %v463
    %v469 = vmul.f32 %v390, %v468
    %v470 = vrcp.pop %v412
    %v471 = vmul.f32 %v412, %v470
    %v472 = vsub.f32 1.0, %v471
    %v473 = vmul.f32 %v470, %v472
    %v474 = vadd.f32 %v470, %v473
    %vm475 = vweird.f32 %v412
    %vm476 = vweird.f32 %v470
    %vm477 = vmor %vm475, %vm476
    %v478 = vsel %vm477, %v470, %v474
    %v479 = vand.u32 2147483647, %v412
    %vm480 = vcmp.eq.f32.partialorder %v479, 8.507059e+37
    %v481 = vand.u32 %v412, 2147483648
    %v482 = vor.u32 1.1754944e-38, %v481
    %v483 = vsel %vm480, %v482, %v478
    %v484 = vmul.f32 %v392, %v483
    %v485 = vrcp.pop %v415
    %v486 = vmul.f32 %v415, %v485
    %v487 = vsub.f32 1.0, %v486
    %v488 = vmul.f32 %v485, %v487
    %v489 = vadd.f32 %v485, %v488
    %vm490 = vweird.f32 %v415
    %vm491 = vweird.f32 %v485
    %vm492 = vmor %vm490, %vm491
    %v493 = vsel %vm492, %v485, %v489
    %v494 = vand.u32 2147483647, %v415
    %vm495 = vcmp.eq.f32.partialorder %v494, 8.507059e+37
    %v496 = vand.u32 %v415, 2147483648
    %v497 = vor.u32 1.1754944e-38, %v496
    %v498 = vsel %vm495, %v497, %v493
    %v499 = vmul.f32 %v394, %v498
    %v500 = vrcp.pop %v418
    %v501 = vmul.f32 %v418, %v500
    %v502 = vsub.f32 1.0, %v501
    %v503 = vmul.f32 %v500, %v502
    %v504 = vadd.f32 %v500, %v503
    %vm505 = vweird.f32 %v418
    %vm506 = vweird.f32 %v500
    %vm507 = vmor %vm505, %vm506
    %v508 = vsel %vm507, %v500, %v504
    %v509 = vand.u32 2147483647, %v418
    %vm510 = vcmp.eq.f32.partialorder %v509, 8.507059e+37
    %v511 = vand.u32 %v418, 2147483648
    %v512 = vor.u32 1.1754944e-38, %v511
    %v513 = vsel %vm510, %v512, %v508
    %v514 = vmul.f32 %v396, %v513
    %v515 = vrcp.pop %v421
    %v516 = vmul.f32 %v421, %v515
    %v517 = vsub.f32 1.0, %v516
    %v518 = vmul.f32 %v515, %v517
    %v519 = vadd.f32 %v515, %v518
    %vm520 = vweird.f32 %v421
    %vm521 = vweird.f32 %v515
    %vm522 = vmor %vm520, %vm521
    %v523 = vsel %vm522, %v515, %v519
    %v524 = vand.u32 2147483647, %v421
    %vm525 = vcmp.eq.f32.partialorder %v524, 8.507059e+37
    %v526 = vand.u32 %v421, 2147483648
    %v527 = vor.u32 1.1754944e-38, %v526
    %v528 = vsel %vm525, %v527, %v523
    %v529 = vmul.f32 %v398, %v528
    %v530 = vrcp.pop %v424
    %v531 = vmul.f32 %v424, %v530
    %v532 = vsub.f32 1.0, %v531
    %v533 = vmul.f32 %v530, %v532
    %v534 = vadd.f32 %v530, %v533
    %vm535 = vweird.f32 %v424
    %vm536 = vweird.f32 %v530
    %vm537 = vmor %vm535, %vm536
    %v538 = vsel %vm537, %v530, %v534
    %v539 = vand.u32 2147483647, %v424
    %vm540 = vcmp.eq.f32.partialorder %v539, 8.507059e+37
    %v541 = vand.u32 %v424, 2147483648
    %v542 = vor.u32 1.1754944e-38, %v541
    %v543 = vsel %vm540, %v542, %v538
    %v544 = vmul.f32 %v400, %v543
    %v545 = vpack.c.bf16 %v439, %v439
    %v546 = vpack.c.bf16 %v454, %v454
    %v547 = vpack.c.bf16 %v469, %v469
    %v548 = vpack.c.bf16 %v484, %v484
    %v549 = vpack.c.bf16 %v499, %v499
    %v550 = vpack.c.bf16 %v514, %v514
    %v551 = vpack.c.bf16 %v529, %v529
    %v552 = vpack.c.bf16 %v544, %v544
    %553 = vrot.lane.b32.xlu0 %v162, 64
    %v554 = vpop.permute.xlu0 %553
    %v556 = vsel %vm165, %v545, 0
    %vm558 = vcmask 1043456
    %v560 = vsel %vm558, %v554, 0
    %562 = vmatpush.bf16.msra.mxu0 0
    %563 = vmatpush.bf16.msra.mxu0 0
    %564 = vmatpush.bf16.msra.mxu0 0
    %565 = vmatpush.bf16.msra.mxu0 0
    %566 = vmatpush.bf16.msra.mxu0 0
    %567 = vmatpush.bf16.msra.mxu0 0
    %568 = vmatpush.bf16.msra.mxu0 0
    %569 = vmatpush.bf16.msra.mxu0 %v560
    %570 = vmatmul.bf16.gmra.mxu0 %v556
    %v571 = vpop.f32.mrf.mxu0
    %v572 = vadd.f32 0.0, %v571
    %v573 = vpop.f32.mrf.mxu0
    %574 = vdwg.mxu0
    %575 = vrot.lane.b32.xlu0 %v187, 64
    %v576 = vpop.permute.xlu0 %575
    %v578 = vsel %vm165, %v546, 0
    %v581 = vsel %vm558, %v576, 0
    %583 = vmatpush.bf16.msra.mxu0 0
    %584 = vmatpush.bf16.msra.mxu0 0
    %585 = vmatpush.bf16.msra.mxu0 0
    %586 = vmatpush.bf16.msra.mxu0 0
    %587 = vmatpush.bf16.msra.mxu0 0
    %588 = vmatpush.bf16.msra.mxu0 0
    %589 = vmatpush.bf16.msra.mxu0 0
    %590 = vmatpush.bf16.msra.mxu0 %v581
    %591 = vmatmul.bf16.gmra.mxu0 %v578
    %v592 = vpop.f32.mrf.mxu0
    %v593 = vadd.f32 0.0, %v592
    %v594 = vpop.f32.mrf.mxu0
    %595 = vdwg.mxu0
    %596 = vrot.lane.b32.xlu0 %v211, 64
    %v597 = vpop.permute.xlu0 %596
    %v599 = vsel %vm165, %v547, 0
    %v602 = vsel %vm558, %v597, 0
    %604 = vmatpush.bf16.msra.mxu0 0
    %605 = vmatpush.bf16.msra.mxu0 0
    %606 = vmatpush.bf16.msra.mxu0 0
    %607 = vmatpush.bf16.msra.mxu0 0
    %608 = vmatpush.bf16.msra.mxu0 0
    %609 = vmatpush.bf16.msra.mxu0 0
    %610 = vmatpush.bf16.msra.mxu0 0
    %611 = vmatpush.bf16.msra.mxu0 %v602
    %612 = vmatmul.bf16.gmra.mxu0 %v599
    %v613 = vpop.f32.mrf.mxu0
    %v614 = vadd.f32 0.0, %v613
    %v615 = vpop.f32.mrf.mxu0
    %616 = vdwg.mxu0
    %617 = vrot.lane.b32.xlu0 %v235, 64
    %v618 = vpop.permute.xlu0 %617
    %v620 = vsel %vm165, %v548, 0
    %v623 = vsel %vm558, %v618, 0
    %625 = vmatpush.bf16.msra.mxu0 0
    %626 = vmatpush.bf16.msra.mxu0 0
    %627 = vmatpush.bf16.msra.mxu0 0
    %628 = vmatpush.bf16.msra.mxu0 0
    %629 = vmatpush.bf16.msra.mxu0 0
    %630 = vmatpush.bf16.msra.mxu0 0
    %631 = vmatpush.bf16.msra.mxu0 0
    %632 = vmatpush.bf16.msra.mxu0 %v623
    %633 = vmatmul.bf16.gmra.mxu0 %v620
    %v634 = vpop.f32.mrf.mxu0
    %v635 = vadd.f32 0.0, %v634
    %v636 = vpop.f32.mrf.mxu0
    %637 = vdwg.mxu0
    %638 = vrot.lane.b32.xlu0 %v259, 64
    %v639 = vpop.permute.xlu0 %638
    %v641 = vsel %vm165, %v549, 0
    %v644 = vsel %vm558, %v639, 0
    %646 = vmatpush.bf16.msra.mxu0 0
    %647 = vmatpush.bf16.msra.mxu0 0
    %648 = vmatpush.bf16.msra.mxu0 0
    %649 = vmatpush.bf16.msra.mxu0 0
    %650 = vmatpush.bf16.msra.mxu0 0
    %651 = vmatpush.bf16.msra.mxu0 0
    %652 = vmatpush.bf16.msra.mxu0 0
    %653 = vmatpush.bf16.msra.mxu0 %v644
    %654 = vmatmul.bf16.gmra.mxu0 %v641
    %v655 = vpop.f32.mrf.mxu0
    %v656 = vadd.f32 0.0, %v655
    %v657 = vpop.f32.mrf.mxu0
    %658 = vdwg.mxu0
    %659 = vrot.lane.b32.xlu0 %v283, 64
    %v660 = vpop.permute.xlu0 %659
    %v662 = vsel %vm165, %v550, 0
    %v665 = vsel %vm558, %v660, 0
    %667 = vmatpush.bf16.msra.mxu0 0
    %668 = vmatpush.bf16.msra.mxu0 0
    %669 = vmatpush.bf16.msra.mxu0 0
    %670 = vmatpush.bf16.msra.mxu0 0
    %671 = vmatpush.bf16.msra.mxu0 0
    %672 = vmatpush.bf16.msra.mxu0 0
    %673 = vmatpush.bf16.msra.mxu0 0
    %674 = vmatpush.bf16.msra.mxu0 %v665
    %675 = vmatmul.bf16.gmra.mxu0 %v662
    %v676 = vpop.f32.mrf.mxu0
    %v677 = vadd.f32 0.0, %v676
    %v678 = vpop.f32.mrf.mxu0
    %679 = vdwg.mxu0
    %680 = vrot.lane.b32.xlu0 %v307, 64
    %v681 = vpop.permute.xlu0 %680
    %v683 = vsel %vm165, %v551, 0
    %v686 = vsel %vm558, %v681, 0
    %688 = vmatpush.bf16.msra.mxu0 0
    %689 = vmatpush.bf16.msra.mxu0 0
    %690 = vmatpush.bf16.msra.mxu0 0
    %691 = vmatpush.bf16.msra.mxu0 0
    %692 = vmatpush.bf16.msra.mxu0 0
    %693 = vmatpush.bf16.msra.mxu0 0
    %694 = vmatpush.bf16.msra.mxu0 0
    %695 = vmatpush.bf16.msra.mxu0 %v686
    %696 = vmatmul.bf16.gmra.mxu0 %v683
    %v697 = vpop.f32.mrf.mxu0
    %v698 = vadd.f32 0.0, %v697
    %v699 = vpop.f32.mrf.mxu0
    %700 = vdwg.mxu0
    %701 = vrot.lane.b32.xlu0 %v331, 64
    %v702 = vpop.permute.xlu0 %701
    %v704 = vsel %vm165, %v552, 0
    %v707 = vsel %vm558, %v702, 0
    %709 = vmatpush.bf16.msra.mxu0 0
    %710 = vmatpush.bf16.msra.mxu0 0
    %711 = vmatpush.bf16.msra.mxu0 0
    %712 = vmatpush.bf16.msra.mxu0 0
    %713 = vmatpush.bf16.msra.mxu0 0
    %714 = vmatpush.bf16.msra.mxu0 0
    %715 = vmatpush.bf16.msra.mxu0 0
    %716 = vmatpush.bf16.msra.mxu0 %v707
    %717 = vmatmul.bf16.gmra.mxu0 %v704
    %v718 = vpop.f32.mrf.mxu0
    %v719 = vadd.f32 0.0, %v718
    %v720 = vpop.f32.mrf.mxu0
    %721 = vdwg.mxu0
    %724 = vrot.lane.b32.xlu0 %v614, 8
    %v725 = vpop.permute.xlu0 %724
    %726 = vrot.lane.b32.xlu0 %v635, 8
    %v727 = vpop.permute.xlu0 %726
    %732 = vrot.lane.b32.xlu0 %v656, 16
    %v733 = vpop.permute.xlu0 %732
    %734 = vrot.lane.b32.xlu0 %v677, 16
    %v735 = vpop.permute.xlu0 %734
    %740 = vrot.lane.b32.xlu0 %v698, 24
    %v741 = vpop.permute.xlu0 %740
    %742 = vrot.lane.b32.xlu0 %v719, 24
    %v743 = vpop.permute.xlu0 %742
    %v746 = vsel %vm165, %v572, %v725
    %v747 = vsel %vm165, %v593, %v727
    %v748 = vsel %vm84, %v746, %v733
    %v749 = vsel %vm84, %v747, %v735
    %vm750 = vcmask 195584
    %v751 = vsel %vm750, %v748, %v741
    %v752 = vsel %vm750, %v749, %v743
    %v753 = vpack.c.bf16 %v752, %v751
    %v754 = vld [vmem:[#allocation7] sm:$0xf]
    %v755 = vld [vmem:[#allocation7 + $0x4] sm:$0xf]
    %v756 = vld [vmem:[#allocation7 + $0x8] sm:$0xf]
    %v757 = vld [vmem:[#allocation7 + $0xc] sm:$0xf]
    %v758 = vld [vmem:[%s4] sm:$0x1]
    %v760 = vperm.slane %v758, 0
    %v766 = vunpack.c.l.b16 %v754
    %v767 = vunpack.c.l.b16 %v755
    %v768 = vunpack.c.l.b16 %v756
    %v769 = vunpack.c.l.b16 %v757
    %v770 = vpack.c.b16 %v767, %v766
    %v771 = vpack.c.b16 %v769, %v768
    %vm774 = vcmask 261120
    %v776 = vsel %vm774, %v753, 0
    %778 = vmatpush.bf16.msra.mxu0 0
    %779 = vmatpush.bf16.msra.mxu0 0
    %780 = vmatpush.bf16.msra.mxu0 0
    %781 = vmatpush.bf16.msra.mxu0 0
    %782 = vmatpush.bf16.msra.mxu0 0
    %783 = vmatpush.bf16.msra.mxu0 0
    %784 = vmatpush.bf16.msra.mxu0 %v771
    %785 = vmatpush.bf16.msra.mxu0 %v770
    %786 = vmatmul.bf16.gmra.mxu0 %v776
    %v787 = vpop.f32.mrf.mxu0
    %v788 = vadd.f32 %v760, %v787
    %v789 = vpop.f32.mrf.mxu0
    %v790 = vadd.f32 %v760, %v789
    %791 = vdwg.mxu0
    %792 = vst.msk [vmem:[#allocation8] sm:$0xff] %vm774, %v788
    %793 = vst.msk [vmem:[#allocation8 + $0x8] sm:$0xff] %vm774, %v790
    // Predicated region
    $region34: #{tpu_custom_call.1} parent=1 // pred_check
      _
    $region35: #{tpu_custom_call.1} parent=1 // pred_check_branch
      %795 = sbr.rel (0) target = $region37
    $region36: #{tpu_custom_call.1} parent=1 // pred_region
      %797 = vsyncadd [#allocation4], 0
      %s798 = sshll.u32 [#allocation8], 4
      %s799 = int_to_ptr.vmem [resolvable:$true] %s798
      %s800 = sshll.u32 %s5, 4
      %s801 = int_to_ptr.hbm [resolvable:$true] %s800
      %806 = dma.vmem_to_hbm [thread:$0]  %s799, 256, %s801, [#allocation4], 128, 128, 8
    $region37: #{tpu_custom_call.1} parent=1 // pred_fallthru
      _
    // Predicated region
    $region38: #{tpu_custom_call.1} parent=1 // pred_check
      _
    $region39: #{tpu_custom_call.1} parent=1 // pred_check_branch
      %808 = sbr.rel (0) target = $region41
    $region40: #{tpu_custom_call.1} parent=1 // pred_region
      %810 = dma.done [#allocation4], 256
    $region41: #{tpu_custom_call.1} parent=1 // pred_fallthru
      _
    %811 = vsyncpa [#allocation3], 1
    %812 = vsyncpa [#allocation6], 1
    %813 = vsyncpa [#allocation4], 1

</llo_original>
